<compile_context>
chip_gen: v6e
topology: v6e:2x2x1
jax: 0.10.0
libtpu: 0.0.40
codegen_flags: <defaults>
</compile_context>

<pallas_src>
import functools

import jax
import jax.numpy as jnp
from jax.experimental import pallas as pl
from jax.experimental.pallas import tpu as pltpu


def _round_up(n, m):
    return ((n + m - 1) // m) * m


def _tpu_budget():
    """(physical VMEM bytes, # TensorCores per chip) with safe fallbacks."""
    vmem = 64 * 1024 * 1024          # v7x-safe default if the query fails
    cores = 1
    try:
        info = pltpu.get_tpu_info()
        vmem = int(getattr(info, "vmem_capacity_bytes", vmem))
        for name in ("tensorcores_per_chip", "num_cores", "core_count"):
            v = getattr(info, name, None)
            if isinstance(v, int) and v >= 1:
                cores = min(v, 2)
                break
    except Exception:
        pass
    return vmem, cores


def _normalize_kernel(x_ref, o_ref, *, power):
    # The full feature dim (PyTorch dim=1) is resident on the lane axis of
    # this block, so the row reduction is entirely in-kernel.
    x = x_ref[...].astype(jnp.float32)
    if power == 2:
        sumsq = jnp.sum(x * x, axis=-1, keepdims=True)
        inv = jax.lax.rsqrt(sumsq)           # EUP slot: free next to VPU work
    else:
        # Keep `power` a Python int so x**power stays integer_pow on the VPU;
        # fold the reciprocal into a single EUP pow.  Negative row-sums with a
        # fractional 1/power NaN, matching the PyTorch module.
        s = jnp.sum(x ** power, axis=-1, keepdims=True)
        inv = s ** (-1.0 / power)
    o_ref[...] = (x * inv).astype(o_ref.dtype)


def normalize(x, *, power=2, tile_rows=None):
    """Row-wise Lp (default L2) normalize a (N, D) array via a Pallas kernel.

    out[i, :] = x[i, :] / (sum_j x[i, j] ** power) ** (1 / power)
    """
    N, D = x.shape
    itemsize = jnp.dtype(x.dtype).itemsize
    # Native sublane multiple: 8 for 32-bit, 16 for bf16/f16, 32 for int8/fp8.
    sub = max(8, 32 // itemsize)

    vmem_cap, n_cores = _tpu_budget()
    # ~1/3 of physical VMEM for the pipelined block buffers, scoped limit at
    # ~3/4 of physical (capped at 96 MiB).
    buffer_budget = vmem_cap // 3
    vmem_limit = min((vmem_cap * 3) // 4, 96 * 1024 * 1024)

    # Per-row VMEM footprint: 2 input + 2 output double-buffered blocks in the
    # I/O dtype plus the live in-kernel f32 copy of the block.
    bytes_per_row = D * (4 * itemsize + 4)

    if tile_rows is None:
        max_rows = max(sub, (buffer_budget // bytes_per_row) // sub * sub)
        # TODO(synk): if even a (sub, D) block exceeds the VMEM budget (huge
        # D), a D-tiled two-pass reduction would be required; not implemented.
        if N <= max_rows and n_cores <= 1:
            # One full-extent block: single grid step, legal even when N is
            # not a multiple of the sublane count (block dim == array dim).
            tile_rows = N
        else:
            tile_rows = min(max_rows, _round_up(N, sub))
            if n_cores >= 2:
                # Keep an even number of 'parallel' grid steps so both
                # TensorCores get equal shares of the work.
                tile_rows = min(tile_rows, _round_up(pl.cdiv(N, 2), sub))
                steps = pl.cdiv(N, tile_rows)
                if steps > 1 and steps % 2 == 1:
                    tile_rows = max(sub, _round_up(pl.cdiv(N, steps + 1), sub))
            if tile_rows >= N:
                tile_rows = N

    grid = (pl.cdiv(N, tile_rows),)
    kernel = functools.partial(_normalize_kernel, power=power)

    # Ragged last block: out-of-range rows are never written back, so no
    # jnp.pad / output slice (each would cost a full extra HBM pass).
    return pl.pallas_call(
        kernel,
        out_shape=jax.ShapeDtypeStruct((N, D), x.dtype),
        grid_spec=pltpu.PrefetchScalarGridSpec(
            num_scalar_prefetch=0,
            grid=grid,
            in_specs=[pl.BlockSpec((tile_rows, D), lambda i: (i, 0))],
            out_specs=pl.BlockSpec((tile_rows, D), lambda i: (i, 0)),
        ),
        compiler_params=pltpu.CompilerParams(
            dimension_semantics=("parallel",),
            vmem_limit_bytes=vmem_limit,
        ),
    )(x)


if __name__ == "__main__":
    key = jax.random.PRNGKey(0)
    k1, k2, k3, k4 = jax.random.split(key, 4)

    # Case 1: f32, single block.
    x1 = jax.random.normal(k1, (8, 128), dtype=jnp.float32)
    out1 = jax.block_until_ready(normalize(x1))
    ref1 = x1 / jnp.sqrt(jnp.sum(x1 * x1, axis=1, keepdims=True))
    assert out1.shape == x1.shape and out1.dtype == x1.dtype
    assert jnp.allclose(out1, ref1, atol=1e-5, rtol=1e-5)

    # Case 2: bf16 input, N not a multiple of the sublane count
    # (full-extent single block).
    x2 = jax.random.normal(k2, (6, 256), dtype=jnp.bfloat16)
    out2 = jax.block_until_ready(normalize(x2))
    x2f = x2.astype(jnp.float32)
    ref2 = x2f / jnp.sqrt(jnp.sum(x2f * x2f, axis=1, keepdims=True))
    assert out2.shape == x2.shape and out2.dtype == x2.dtype
    assert jnp.allclose(out2.astype(jnp.float32), ref2, atol=2e-2, rtol=2e-2)

    # Case 3: ragged last block (N % tile_rows != 0) — no-pad path with
    # write-back clipping on the final block.
    x3 = jax.random.normal(k3, (20, 128), dtype=jnp.float32)
    out3 = jax.block_until_ready(normalize(x3, tile_rows=8))
    ref3 = x3 / jnp.sqrt(jnp.sum(x3 * x3, axis=1, keepdims=True))
    assert out3.shape == x3.shape
    assert jnp.allclose(out3, ref3, atol=1e-5, rtol=1e-5)

    # Case 4: generic-power path (power=3) on positive inputs.
    x4 = jnp.abs(jax.random.normal(k4, (8, 128), dtype=jnp.float32)) + 0.1
    out4 = jax.block_until_ready(normalize(x4, power=3))
    s4 = jnp.sum(x4 ** 3, axis=1, keepdims=True)
    ref4 = x4 / (s4 ** (1.0 / 3.0))
    assert jnp.allclose(out4, ref4, atol=1e-4, rtol=1e-4)

    print("KERNEL_OK")
</pallas_src>

<mosaic_0001>
module attributes {stable_mosaic.version = 11 : i64} {
  func.func @_normalize_kernel(%arg0: i32, %arg1: memref<8x128xf32, #tpu.memory_space<vmem>>, %arg2: memref<8x128xf32, #tpu.memory_space<vmem>>) attributes {dimension_semantics = [#tpu.dimension_semantics<parallel>], iteration_bounds = array<i64: 1>, scalar_prefetch = 0 : i64, scratch_operands = 0 : i64, tpu.core_type = #tpu.core_type<tc>, window_params = [{transform_indices = @transform_0, window_bounds = array<i64: 8, 128>}, {transform_indices = @transform_1, window_bounds = array<i64: 8, 128>}]} {
    %c0 = arith.constant 0 : index
    %c0_0 = arith.constant 0 : index
    %0 = vector.load %arg1[%c0, %c0_0] : memref<8x128xf32, #tpu.memory_space<vmem>>, vector<8x128xf32>
    %1 = arith.mulf %0, %0 : vector<8x128xf32>
    %cst = arith.constant dense<0.000000e+00> : vector<8xf32>
    %2 = vector.multi_reduction <add>, %1, %cst [1] : vector<8x128xf32> to vector<8xf32>
    %3 = vector.shape_cast %2 : vector<8xf32> to vector<8x1xf32>
    %4 = math.rsqrt %3 : vector<8x1xf32>
    %5 = vector.broadcast %4 : vector<8x1xf32> to vector<8x128xf32>
    %6 = arith.mulf %0, %5 : vector<8x128xf32>
    %c0_1 = arith.constant 0 : index
    %c0_2 = arith.constant 0 : index
    %7 = vector.load %arg2[%c0_1, %c0_2] : memref<8x128xf32, #tpu.memory_space<vmem>>, vector<8x128xf32>
    tpu.vector_store %arg2[%c0_1, %c0_2], %6 {strides = array<i32>} : memref<8x128xf32, #tpu.memory_space<vmem>>, vector<8x128xf32>,
    return
  }
  func.func @transform_0(%arg0: i32) -> (i32, i32) {
    %c0_i32 = arith.constant 0 : i32
    %c0_i32_0 = arith.constant 0 : i32
    return %arg0, %c0_i32 : i32, i32
  }
  func.func @transform_1(%arg0: i32) -> (i32, i32) {
    %c0_i32 = arith.constant 0 : i32
    %c0_i32_0 = arith.constant 0 : i32
    return %arg0, %c0_i32 : i32, i32
  }
}

</mosaic_0001>

<llo_original>
// kernel: tpu_custom_call.1
$region0: #{tpu_custom_call.1}
  #allocation0 [shape = 'u32[]', space=smem, size = 0x4, offset = 0x4, fixed_abs, tag = 'smem constant byte address 0x4 - core index']
  #allocation1 [shape = 'u32[144,128]{1,0:T(1,128)}', space=vmem, size = 0x12000, scoped, tag = 'internal scratch']
  %s0 = inlined_call_operand.hbm [shape: f32[8,128], index: 0, kind: input, shape index: {}]
  %s1 = inlined_call_operand.hbm [shape: f32[8,128], index: 1, kind: output, shape index: {}]
  %s2 = sld [smem:[#allocation0]]
  $region18: #{tpu_custom_call.1} parent=0
    _
  %s4 = ssub.s32 1, %s2
  %s5 = scalar_select 0, %s4, %s2
  $region1: #{tpu_custom_call.1} parent=0
    #allocation2 [shape = 'u8[4096]{0}', space=vmem, size = 0x1000, scoped, tag = 'input window, operand 0, single buffered']
    #allocation3 [shape = 's32[1]{0}', space=sflag, size = 0x4, scoped, tag = 'scoped memory for tpu_custom_call.1']
    #allocation4 [shape = 's32[1]{0}', space=sflag, size = 0x4, scoped, tag = 'scoped memory for tpu_custom_call.1']
    #allocation5 [shape = 'u8[4096]{0}', space=vmem, size = 0x1000, scoped, tag = 'output window, operand 0, single buffered']
    %6 = vsyncpa [#allocation3], 0
    %7 = vsyncpa [#allocation4], 0
    // Predicated region
    $region2: #{tpu_custom_call.1} parent=1 // pred_check
      _
    $region3: #{tpu_custom_call.1} parent=1 // pred_check_branch
      %9 = sbr.rel (0) target = $region5
    $region4: #{tpu_custom_call.1} parent=1 // pred_region
      %s11 = ssub.s32 128, 128
      %12 = vsyncadd [#allocation3], %s11
      %s14 = sshll.u32 [#allocation2], 4
      %s15 = int_to_ptr.vmem [resolvable:$true] %s14
      %17 = dma.hbm_to_vmem [thread:$0]  %s0, 128, %s15, [#allocation3]
    $region5: #{tpu_custom_call.1} parent=1 // pred_fallthru
      _
    // Predicated region
    $region6: #{tpu_custom_call.1} parent=1 // pred_check
      _
    $region7: #{tpu_custom_call.1} parent=1 // pred_check_branch
      %19 = sbr.rel (0) target = $region9
    $region8: #{tpu_custom_call.1} parent=1 // pred_region
      %20 = dma.done [#allocation3], 128
    $region9: #{tpu_custom_call.1} parent=1 // pred_fallthru
      _
    %v21 = vld [vmem:[#allocation2] sm:$0xff]
    %v22 = vmul.f32 %v21, %v21
    %23 = vadd.xlane.f32.xlu0 %v22
    %v24 = vpop.xlane.xlu0 %23
    %v25 = vrsqrt.pop %v24
    %v26 = vmul.f32 %v21, %v25
    %27 = vst [vmem:[#allocation5] sm:$0xff] %v26
    // Predicated region
    $region10: #{tpu_custom_call.1} parent=1 // pred_check
      _
    $region11: #{tpu_custom_call.1} parent=1 // pred_check_branch
      %29 = sbr.rel (0) target = $region13
    $region12: #{tpu_custom_call.1} parent=1 // pred_region
      %s31 = ssub.s32 128, 128
      %32 = vsyncadd [#allocation4], %s31
      %s34 = sshll.u32 [#allocation5], 4
      %s35 = int_to_ptr.vmem [resolvable:$true] %s34
      %37 = dma.vmem_to_hbm [thread:$0]  %s35, 128, %s1, [#allocation4]
    $region13: #{tpu_custom_call.1} parent=1 // pred_fallthru
      _
    // Predicated region
    $region14: #{tpu_custom_call.1} parent=1 // pred_check
      _
    $region15: #{tpu_custom_call.1} parent=1 // pred_check_branch
      %39 = sbr.rel (0) target = $region17
    $region16: #{tpu_custom_call.1} parent=1 // pred_region
      %40 = dma.done [#allocation4], 128
    $region17: #{tpu_custom_call.1} parent=1 // pred_fallthru
      _
    %41 = vsyncpa [#allocation3], 1
    %42 = vsyncpa [#allocation4], 1

</llo_original>
